<compile_context>
chip_gen: v5e
topology: v5e:2x2
jax: 0.10.0
libtpu: 0.0.40
codegen_flags: <defaults>
</compile_context>

<pallas_src>
import functools

import jax
import jax.numpy as jnp
from jax.experimental import pallas as pl
from jax.experimental.pallas import tpu as pltpu

LANE = 128
SUBLANE = 8
MAX_BATCH_TILE = 256      # per-grid-step batch tile (multiple of 8)

_VMEM = pl.BlockSpec(memory_space=pltpu.MemorySpace.VMEM)


def _round_up(x, m):
  return (x + m - 1) // m * m


def _gate_math_in_bf16():
  """bf16 VPU/EUP exists on v6e/v7x only; keep f32 elsewhere (v5e has none)."""
  try:
    kind = jax.devices()[0].device_kind.lower()
  except Exception:
    return False
  return any(tag in kind for tag in ("v6", "v7", "7x"))


# ----------------------------- fused Pallas kernel -----------------------------

def _make_fused_kernel(num_layers, hidden_dim, gate_width, bf16_gates):
  """Fused (num_layers x LSTM cell, seq=1, zero state) + FC head kernel.

  Ref order:
    x      (Bt, d_in0)     bf16
    w0     (d_in0, gp)     bf16   layer-0 packed [Wi | Wg | Wo]^T
    w_rest (L-1, h_w, gp)  bf16   layers 1..L-1 (only present if L > 1)
    b      (L, 1, gp)      f32    b_ih + b_hh, packed [bi | bg | bo]
    w_fc   (h_w, Cp)       bf16
    b_fc   (1, Cp)         f32
    out    (Bt, Cp)        f32
  gp = gate_width = round_up(3*H, 128); h_w = H if H % 128 == 0 else gp.
  """
  H = hidden_dim
  gp = gate_width
  aligned = (H % LANE == 0)
  gate_dtype = jnp.bfloat16 if bf16_gates else jnp.float32

  def lstm_cell(gates):
    # gates: (Bt, gp) f32, packed lane layout [i | g | o | pad].
    if aligned:
      gates = gates.astype(gate_dtype)
      i_g = jax.nn.sigmoid(gates[:, 0 * H:1 * H])
      g_g = jnp.tanh(gates[:, 1 * H:2 * H])
      o_g = jax.nn.sigmoid(gates[:, 2 * H:3 * H])
      h = o_g * jnp.tanh(i_g * g_g)                  # (Bt, H)
    elif not bf16_gates:
      # One sigmoid + one tanh pass over the whole packed vreg, then align
      # g and o to lanes [0,H) with XLU rolls (VALU/EUP untouched).
      sig = jax.nn.sigmoid(gates)                    # i @ [0,H), o @ [2H,3H)
      tnh = jnp.tanh(gates)                          # g @ [H,2H)
      g_g = pltpu.roll(tnh, gp - H, axis=1)          # g -> lanes [0,H)
      o_g = pltpu.roll(sig, gp - 2 * H, axis=1)      # o -> lanes [0,H)
      # Valid in lanes [0,H); lanes [H,gp) hold bounded garbage that the next
      # matmul's zero weight rows annihilate exactly.
      h = o_g * jnp.tanh(sig * g_g)                  # (Bt, gp)
    else:
      # bf16 gate math (v6e/v7x): roll the f32 gates (32-bit lane rotation),
      # then run the transcendental chain in bf16.
      g_gates = pltpu.roll(gates, gp - H, axis=1).astype(gate_dtype)
      o_gates = pltpu.roll(gates, gp - 2 * H, axis=1).astype(gate_dtype)
      gates = gates.astype(gate_dtype)
      c = jax.nn.sigmoid(gates) * jnp.tanh(g_gates)  # i*g in lanes [0,H)
      h = jax.nn.sigmoid(o_gates) * jnp.tanh(c)      # valid in lanes [0,H)
    return h.astype(jnp.bfloat16)

  def kernel(*refs):
    if num_layers > 1:
      x_ref, w0_ref, w_rest_ref, b_ref, w_fc_ref, b_fc_ref, out_ref = refs
    else:
      x_ref, w0_ref, b_ref, w_fc_ref, b_fc_ref, out_ref = refs
      w_rest_ref = None

    h = x_ref[...]                                   # bf16
    for layer in range(num_layers):                  # static unroll
      w = w0_ref[...] if layer == 0 else w_rest_ref[layer - 1]
      # h0 == 0  =>  the h_prev @ W_hh term is identically zero and dropped.
      gates = jnp.dot(h, w, preferred_element_type=jnp.float32) + b_ref[layer]
      h = lstm_cell(gates)

    out_ref[...] = (jnp.dot(h, w_fc_ref[...],
                            preferred_element_type=jnp.float32)
                    + b_fc_ref[...])

  return kernel


# ------------------------------ parameters ------------------------------

def init_params(key, input_dim, hidden_dim, num_layers, num_classes):
  """PyTorch-layout parameters (uniform(-1/sqrt(H), 1/sqrt(H)))."""
  k = float(1.0 / (hidden_dim ** 0.5))
  params = {"lstm": []}
  for layer in range(num_layers):
    d_in = input_dim if layer == 0 else hidden_dim
    key, k1, k2, k3, k4 = jax.random.split(key, 5)
    params["lstm"].append({
        "w_ih": jax.random.uniform(k1, (4 * hidden_dim, d_in), jnp.float32, -k, k),
        "w_hh": jax.random.uniform(k2, (4 * hidden_dim, hidden_dim), jnp.float32, -k, k),
        "b_ih": jax.random.uniform(k3, (4 * hidden_dim,), jnp.float32, -k, k),
        "b_hh": jax.random.uniform(k4, (4 * hidden_dim,), jnp.float32, -k, k),
    })
  key, k5, k6 = jax.random.split(key, 3)
  params["fc"] = {
      "w": jax.random.uniform(k5, (num_classes, hidden_dim), jnp.float32, -k, k),
      "b": jax.random.uniform(k6, (num_classes,), jnp.float32, -k, k),
  }
  return params


def prepare_params(params, input_dim, hidden_dim, num_layers, num_classes):
  """Pad/transpose/cast PyTorch-layout params into the fused-kernel layout.

  * Forget gate dropped (dead for seq_len == 1 with c0 == 0).
  * Live gates (i, g, o) packed at natural width: gp = round_up(3*H, 128).
  * Inter-layer h width: H if H % 128 == 0 else gp (the extra lanes are made
    inert by zero weight rows).
  """
  H = hidden_dim
  gp = _round_up(3 * H, LANE)
  cp = _round_up(num_classes, LANE)
  h_w = H if H % LANE == 0 else gp

  w_layers = []
  b_layers = []
  for l in range(num_layers):
    lp = params["lstm"][l]
    d_in = input_dim if l == 0 else H
    d_in_pad = input_dim if l == 0 else h_w
    w4 = lp["w_ih"].reshape(4, H, d_in)                 # PyTorch gate order i,f,g,o
    w3 = jnp.stack([w4[0], w4[2], w4[3]], axis=0)       # keep i, g, o
    w_t = jnp.transpose(w3, (2, 0, 1)).reshape(d_in, 3 * H)
    w_pad = jnp.zeros((d_in_pad, gp), jnp.float32).at[:d_in, :3 * H].set(w_t)
    w_layers.append(w_pad.astype(jnp.bfloat16))

    b4 = (lp["b_ih"] + lp["b_hh"]).reshape(4, H)
    b3 = jnp.stack([b4[0], b4[2], b4[3]], axis=0).reshape(1, 3 * H)
    b_layers.append(jnp.zeros((1, gp), jnp.float32).at[:, :3 * H].set(b3))

  w_fc_pad = jnp.zeros((h_w, cp), jnp.float32)
  w_fc_pad = w_fc_pad.at[:H, :num_classes].set(params["fc"]["w"].T)
  b_fc_pad = jnp.zeros((1, cp), jnp.float32).at[0, :num_classes].set(
      params["fc"]["b"])

  kparams = {
      "w0": w_layers[0],                                # (d_in0, gp) bf16
      "b": jnp.stack(b_layers, axis=0),                 # (L, 1, gp)  f32
      "fc_w": w_fc_pad.astype(jnp.bfloat16),            # (h_w, cp)   bf16
      "fc_b": b_fc_pad,                                 # (1, cp)     f32
  }
  if num_layers > 1:
    kparams["w_rest"] = jnp.stack(w_layers[1:], axis=0)  # (L-1, h_w, gp) bf16
  return kparams


# ------------------------------ forward pass ------------------------------

@functools.partial(
    jax.jit,
    static_argnames=("hidden_dim", "num_layers", "num_classes",
                     "bf16_gate_math"))
def rnn_model_forward(kparams, x, *, hidden_dim, num_layers, num_classes,
                      bf16_gate_math=False):
  """RNNModel forward.  x: (batch, input_dim) f32.  seq_len==1, zero state."""
  batch, input_dim = x.shape
  gp = kparams["b"].shape[-1]
  cp = kparams["fc_w"].shape[1]
  h_w = kparams["fc_w"].shape[0]

  # Batch tiling: one grid step per tile, marked "parallel" so big batches
  # shard across v7x's two TensorCores.  Demo batch -> grid (1,).
  b_min = _round_up(batch, SUBLANE)
  b_tile = b_min if b_min <= MAX_BATCH_TILE else MAX_BATCH_TILE
  b_pad = _round_up(batch, b_tile)

  x_pad = jnp.zeros((b_pad, input_dim), jnp.bfloat16)
  x_pad = x_pad.at[:batch].set(x.astype(jnp.bfloat16))

  inputs = [x_pad, kparams["w0"]]
  if num_layers > 1:
    inputs.append(kparams["w_rest"])
  inputs += [kparams["b"], kparams["fc_w"], kparams["fc_b"]]

  flops = 2 * b_pad * (input_dim * gp
                       + (num_layers - 1) * h_w * gp
                       + h_w * cp)
  transcendentals = b_pad * num_layers * 3 * gp
  bytes_accessed = (sum(int(a.size) * a.dtype.itemsize for a in inputs)
                    + b_pad * cp * 4)

  kernel = _make_fused_kernel(num_layers, hidden_dim, gp, bf16_gate_math)

  in_specs = ([pl.BlockSpec((b_tile, input_dim), lambda i: (i, 0))]
              + [_VMEM] * (len(inputs) - 1))

  out = pl.pallas_call(
      kernel,
      out_shape=jax.ShapeDtypeStruct((b_pad, cp), jnp.float32),
      grid=(b_pad // b_tile,),
      in_specs=in_specs,
      out_specs=pl.BlockSpec((b_tile, cp), lambda i: (i, 0)),
      compiler_params=pltpu.CompilerParams(
          dimension_semantics=("parallel",)),
      cost_estimate=pl.CostEstimate(
          flops=flops, transcendentals=transcendentals,
          bytes_accessed=bytes_accessed),
  )(*inputs)
  return out[:batch, :num_classes]


# ------------------------- pure-JAX reference (f32) -------------------------

def rnn_model_reference(params, x, hidden_dim, num_layers):
  """Full LSTM math (incl. h@W_hh, forget gate) with zero initial state, seq=1."""
  batch = x.shape[0]
  layer_in = x
  for l in range(num_layers):
    lp = params["lstm"][l]
    h = jnp.zeros((batch, hidden_dim), jnp.float32)
    c = jnp.zeros((batch, hidden_dim), jnp.float32)
    gates = (layer_in @ lp["w_ih"].T + h @ lp["w_hh"].T
             + lp["b_ih"][None, :] + lp["b_hh"][None, :])
    i_g = jax.nn.sigmoid(gates[:, 0 * hidden_dim:1 * hidden_dim])
    f_g = jax.nn.sigmoid(gates[:, 1 * hidden_dim:2 * hidden_dim])
    g_g = jnp.tanh(gates[:, 2 * hidden_dim:3 * hidden_dim])
    o_g = jax.nn.sigmoid(gates[:, 3 * hidden_dim:4 * hidden_dim])
    c = f_g * c + i_g * g_g
    layer_in = o_g * jnp.tanh(c)
  return layer_in @ params["fc"]["w"].T + params["fc"]["b"][None, :]


# ---------------------------------- main -----------------------------------

if __name__ == "__main__":
  input_dim, hidden_dim, num_layers, num_classes = 16, 32, 2, 10
  batch = 4

  key = jax.random.PRNGKey(0)
  key_p, key_x = jax.random.split(key)
  params = init_params(key_p, input_dim, hidden_dim, num_layers, num_classes)
  kparams = prepare_params(params, input_dim, hidden_dim, num_layers,
                           num_classes)
  x = jax.random.normal(key_x, (batch, input_dim), jnp.float32)

  out = rnn_model_forward(kparams, x, hidden_dim=hidden_dim,
                          num_layers=num_layers, num_classes=num_classes,
                          bf16_gate_math=_gate_math_in_bf16())
  jax.block_until_ready(out)
  assert out.shape == (batch, num_classes), out.shape

  ref = rnn_model_reference(params, x, hidden_dim, num_layers)
  max_err = float(jnp.max(jnp.abs(out - ref)))
  assert max_err < 5e-2, f"mismatch vs reference: max_err={max_err}"

  print("KERNEL_OK")
</pallas_src>

<mosaic_0001>
module attributes {stable_mosaic.version = 11 : i64} {
  func.func @kernel(%arg0: i32, %arg1: memref<8x16xbf16, #tpu.memory_space<vmem>>, %arg2: memref<16x128xbf16, #tpu.memory_space<vmem>>, %arg3: memref<1x128x128xbf16, #tpu.memory_space<vmem>>, %arg4: memref<2x1x128xf32, #tpu.memory_space<vmem>>, %arg5: memref<128x128xbf16, #tpu.memory_space<vmem>>, %arg6: memref<1x128xf32, #tpu.memory_space<vmem>>, %arg7: memref<8x128xf32, #tpu.memory_space<vmem>>) attributes {dimension_semantics = [#tpu.dimension_semantics<parallel>], iteration_bounds = array<i64: 1>, scalar_prefetch = 0 : i64, scratch_operands = 0 : i64, tpu.core_type = #tpu.core_type<tc>, window_params = [{transform_indices = @transform_0, window_bounds = array<i64: 8, 16>}, {pipeline_mode = #tpu.pipeline_mode<synchronous>, transform_indices = @transform_1, window_bounds = array<i64: 16, 128>}, {pipeline_mode = #tpu.pipeline_mode<synchronous>, transform_indices = @transform_2, window_bounds = array<i64: 1, 128, 128>}, {pipeline_mode = #tpu.pipeline_mode<synchronous>, transform_indices = @transform_3, window_bounds = array<i64: 2, 1, 128>}, {pipeline_mode = #tpu.pipeline_mode<synchronous>, transform_indices = @transform_4, window_bounds = array<i64: 128, 128>}, {pipeline_mode = #tpu.pipeline_mode<synchronous>, transform_indices = @transform_5, window_bounds = array<i64: 1, 128>}, {transform_indices = @transform_6, window_bounds = array<i64: 8, 128>}]} {
    %c0 = arith.constant 0 : index
    %c0_0 = arith.constant 0 : index
    %0 = vector.load %arg1[%c0, %c0_0] : memref<8x16xbf16, #tpu.memory_space<vmem>>, vector<8x16xbf16>
    %c0_1 = arith.constant 0 : index
    %c0_2 = arith.constant 0 : index
    %1 = vector.load %arg2[%c0_1, %c0_2] : memref<16x128xbf16, #tpu.memory_space<vmem>>, vector<16x128xbf16>
    %cst = arith.constant dense<0.000000e+00> : vector<8x128xf32>
    %2 = tpu.matmul %0, %1, %cst {dimension_numbers = #tpu.dot_dimension_numbers<[1], [0], [0], [1], [0, 0, 1, 1], [], []>} : vector<8x16xbf16>, vector<16x128xbf16>, vector<8x128xf32> -> vector<8x128xf32>
    %c0_3 = arith.constant 0 : index
    %c0_4 = arith.constant 0 : index
    %c0_5 = arith.constant 0 : index
    %3 = vector.load %arg4[%c0_3, %c0_4, %c0_5] : memref<2x1x128xf32, #tpu.memory_space<vmem>>, vector<1x1x128xf32>
    %4 = vector.shape_cast %3 : vector<1x1x128xf32> to vector<1x128xf32>
    %5 = vector.broadcast %4 : vector<1x128xf32> to vector<8x128xf32>
    %6 = arith.addf %2, %5 : vector<8x128xf32>
    %7 = arith.negf %6 : vector<8x128xf32>
    %8 = math.exp %7 : vector<8x128xf32>
    %cst_6 = arith.constant 1.000000e+00 : f32
    %9 = vector.broadcast %cst_6 : f32 to vector<8x128xf32>
    %10 = arith.addf %9, %8 : vector<8x128xf32>
    %11 = arith.divf %9, %10 : vector<8x128xf32>
    %12 = math.tanh %6 : vector<8x128xf32>
    %c96_i32 = arith.constant 96 : i32
    %13 = tpu.dynamic_rotate %12 by %c96_i32 dim 1 : vector<8x128xf32>, i32 -> vector<8x128xf32>
    %c64_i32 = arith.constant 64 : i32
    %14 = tpu.dynamic_rotate %11 by %c64_i32 dim 1 : vector<8x128xf32>, i32 -> vector<8x128xf32>
    %15 = arith.mulf %11, %13 : vector<8x128xf32>
    %16 = math.tanh %15 : vector<8x128xf32>
    %17 = arith.mulf %14, %16 : vector<8x128xf32>
    %18 = arith.truncf %17 : vector<8x128xf32> to vector<8x128xbf16>
    %c0_7 = arith.constant 0 : index
    %c0_8 = arith.constant 0 : index
    %c0_9 = arith.constant 0 : index
    %19 = vector.load %arg3[%c0_7, %c0_8, %c0_9] : memref<1x128x128xbf16, #tpu.memory_space<vmem>>, vector<1x128x128xbf16>
    %20 = vector.shape_cast %19 : vector<1x128x128xbf16> to vector<128x128xbf16>
    %cst_10 = arith.constant dense<0.000000e+00> : vector<8x128xf32>
    %21 = tpu.matmul %18, %20, %cst_10 {dimension_numbers = #tpu.dot_dimension_numbers<[1], [0], [0], [1], [0, 0, 1, 1], [], []>} : vector<8x128xbf16>, vector<128x128xbf16>, vector<8x128xf32> -> vector<8x128xf32>
    %c1 = arith.constant 1 : index
    %c0_11 = arith.constant 0 : index
    %c0_12 = arith.constant 0 : index
    %22 = vector.load %arg4[%c1, %c0_11, %c0_12] : memref<2x1x128xf32, #tpu.memory_space<vmem>>, vector<1x1x128xf32>
    %23 = vector.shape_cast %22 : vector<1x1x128xf32> to vector<1x128xf32>
    %24 = vector.broadcast %23 : vector<1x128xf32> to vector<8x128xf32>
    %25 = arith.addf %21, %24 : vector<8x128xf32>
    %26 = arith.negf %25 : vector<8x128xf32>
    %27 = math.exp %26 : vector<8x128xf32>
    %cst_13 = arith.constant 1.000000e+00 : f32
    %28 = vector.broadcast %cst_13 : f32 to vector<8x128xf32>
    %29 = arith.addf %28, %27 : vector<8x128xf32>
    %30 = arith.divf %28, %29 : vector<8x128xf32>
    %31 = math.tanh %25 : vector<8x128xf32>
    %c96_i32_14 = arith.constant 96 : i32
    %32 = tpu.dynamic_rotate %31 by %c96_i32_14 dim 1 : vector<8x128xf32>, i32 -> vector<8x128xf32>
    %c64_i32_15 = arith.constant 64 : i32
    %33 = tpu.dynamic_rotate %30 by %c64_i32_15 dim 1 : vector<8x128xf32>, i32 -> vector<8x128xf32>
    %34 = arith.mulf %30, %32 : vector<8x128xf32>
    %35 = math.tanh %34 : vector<8x128xf32>
    %36 = arith.mulf %33, %35 : vector<8x128xf32>
    %37 = arith.truncf %36 : vector<8x128xf32> to vector<8x128xbf16>
    %c0_16 = arith.constant 0 : index
    %c0_17 = arith.constant 0 : index
    %38 = vector.load %arg5[%c0_16, %c0_17] : memref<128x128xbf16, #tpu.memory_space<vmem>>, vector<128x128xbf16>
    %cst_18 = arith.constant dense<0.000000e+00> : vector<8x128xf32>
    %39 = tpu.matmul %37, %38, %cst_18 {dimension_numbers = #tpu.dot_dimension_numbers<[1], [0], [0], [1], [0, 0, 1, 1], [], []>} : vector<8x128xbf16>, vector<128x128xbf16>, vector<8x128xf32> -> vector<8x128xf32>
    %c0_19 = arith.constant 0 : index
    %c0_20 = arith.constant 0 : index
    %40 = vector.load %arg6[%c0_19, %c0_20] : memref<1x128xf32, #tpu.memory_space<vmem>>, vector<1x128xf32>
    %41 = vector.broadcast %40 : vector<1x128xf32> to vector<8x128xf32>
    %42 = arith.addf %39, %41 : vector<8x128xf32>
    %c0_21 = arith.constant 0 : index
    %c0_22 = arith.constant 0 : index
    %43 = vector.load %arg7[%c0_21, %c0_22] : memref<8x128xf32, #tpu.memory_space<vmem>>, vector<8x128xf32>
    tpu.vector_store %arg7[%c0_21, %c0_22], %42 {strides = array<i32>} : memref<8x128xf32, #tpu.memory_space<vmem>>, vector<8x128xf32>,
    return
  }
  func.func @transform_0(%arg0: i32) -> (i32, i32) {
    %c0_i32 = arith.constant 0 : i32
    %c0_i32_0 = arith.constant 0 : i32
    return %arg0, %c0_i32 : i32, i32
  }
  func.func @transform_1(%arg0: i32) -> (i32, i32) {
    %c0_i32 = arith.constant 0 : i32
    %c0_i32_0 = arith.constant 0 : i32
    %c0_i32_1 = arith.constant 0 : i32
    return %c0_i32, %c0_i32_0 : i32, i32
  }
  func.func @transform_2(%arg0: i32) -> (i32, i32, i32) {
    %c0_i32 = arith.constant 0 : i32
    %c0_i32_0 = arith.constant 0 : i32
    %c0_i32_1 = arith.constant 0 : i32
    %c0_i32_2 = arith.constant 0 : i32
    return %c0_i32, %c0_i32_0, %c0_i32_1 : i32, i32, i32
  }
  func.func @transform_3(%arg0: i32) -> (i32, i32, i32) {
    %c0_i32 = arith.constant 0 : i32
    %c0_i32_0 = arith.constant 0 : i32
    %c0_i32_1 = arith.constant 0 : i32
    %c0_i32_2 = arith.constant 0 : i32
    return %c0_i32, %c0_i32_0, %c0_i32_1 : i32, i32, i32
  }
  func.func @transform_4(%arg0: i32) -> (i32, i32) {
    %c0_i32 = arith.constant 0 : i32
    %c0_i32_0 = arith.constant 0 : i32
    %c0_i32_1 = arith.constant 0 : i32
    return %c0_i32, %c0_i32_0 : i32, i32
  }
  func.func @transform_5(%arg0: i32) -> (i32, i32) {
    %c0_i32 = arith.constant 0 : i32
    %c0_i32_0 = arith.constant 0 : i32
    %c0_i32_1 = arith.constant 0 : i32
    return %c0_i32, %c0_i32_0 : i32, i32
  }
  func.func @transform_6(%arg0: i32) -> (i32, i32) {
    %c0_i32 = arith.constant 0 : i32
    %c0_i32_0 = arith.constant 0 : i32
    return %arg0, %c0_i32 : i32, i32
  }
}

</mosaic_0001>

<llo_original>
// kernel: rnn_model_forward.1
$region0: #{rnn_model_forward.1}
  #allocation0 [shape = 'u32[]', space=smem, size = 0x4, offset = 0x4, fixed_abs, tag = 'smem constant byte address 0x4 - core index']
  #allocation1 [shape = 'u32[72,128]{1,0:T(1,128)}', space=vmem, size = 0x9000, scoped, tag = 'internal scratch']
  %s0 = inlined_call_operand.vmem [shape: bf16[8,16], index: 0, kind: input, shape index: {}]
  %s1 = inlined_call_operand.vmem [shape: bf16[16,128], index: 1, kind: input, shape index: {}]
  %s2 = inlined_call_operand.hbm [shape: bf16[1,128,128], index: 2, kind: input, shape index: {}]
  %s3 = inlined_call_operand.vmem [shape: f32[2,1,128], index: 3, kind: input, shape index: {}]
  %s4 = inlined_call_operand.hbm [shape: bf16[128,128], index: 4, kind: input, shape index: {}]
  %s5 = inlined_call_operand.vmem [shape: f32[1,128], index: 5, kind: input, shape index: {}]
  %s6 = inlined_call_operand.vmem [shape: f32[8,128], index: 6, kind: output, shape index: {}]
  %s7 = sld [smem:[#allocation0]]
  $region42: #{rnn_model_forward.1} parent=0
    _
  %s9 = ssub.s32 1, %s7
  %s10 = scalar_select 0, %s9, %s7
  $region1: #{rnn_model_forward.1} parent=0
    #allocation2 [shape = 'u8[32768]{0}', space=vmem, size = 0x8000, scoped, tag = 'input window, operand 2, single buffered']
    #allocation3 [shape = 's32[1]{0}', space=sflag, size = 0x4, scoped, tag = 'scoped memory for rnn_model_forward.1']
    #allocation4 [shape = 'u8[32768]{0}', space=vmem, size = 0x8000, scoped, tag = 'input window, operand 4, single buffered']
    #allocation5 [shape = 's32[1]{0}', space=sflag, size = 0x4, scoped, tag = 'scoped memory for rnn_model_forward.1']
    %11 = vsyncpa [#allocation3], 0
    %12 = vsyncpa [#allocation5], 0
    // Predicated region
    $region2: #{rnn_model_forward.1} parent=1 // pred_check
      _
    $region3: #{rnn_model_forward.1} parent=1 // pred_check_branch
      %14 = sbr.rel (0) target = $region5
    $region4: #{rnn_model_forward.1} parent=1 // pred_region
      _
    $region5: #{rnn_model_forward.1} parent=1 // pred_fallthru
      _
    // Predicated region
    $region6: #{rnn_model_forward.1} parent=1 // pred_check
      _
    $region7: #{rnn_model_forward.1} parent=1 // pred_check_branch
      %16 = sbr.rel (0) target = $region9
    $region8: #{rnn_model_forward.1} parent=1 // pred_region
      _
    $region9: #{rnn_model_forward.1} parent=1 // pred_fallthru
      _
    // Predicated region
    $region10: #{rnn_model_forward.1} parent=1 // pred_check
      _
    $region11: #{rnn_model_forward.1} parent=1 // pred_check_branch
      %18 = sbr.rel (0) target = $region13
    $region12: #{rnn_model_forward.1} parent=1 // pred_region
      %20 = vsyncadd [#allocation3], 0
      %s21 = sshll.u32 %s2, 4
      %s22 = int_to_ptr.hbm [resolvable:$true] %s21
      %s23 = sshll.u32 [#allocation2], 4
      %s24 = int_to_ptr.vmem [resolvable:$true] %s23
      %29 = dma.hbm_to_vmem [thread:$0]  %s22, 1024, %s24, [#allocation3], 64, 64, 4
    $region13: #{rnn_model_forward.1} parent=1 // pred_fallthru
      _
    // Predicated region
    $region14: #{rnn_model_forward.1} parent=1 // pred_check
      _
    $region15: #{rnn_model_forward.1} parent=1 // pred_check_branch
      %31 = sbr.rel (0) target = $region17
    $region16: #{rnn_model_forward.1} parent=1 // pred_region
      _
    $region17: #{rnn_model_forward.1} parent=1 // pred_fallthru
      _
    // Predicated region
    $region18: #{rnn_model_forward.1} parent=1 // pred_check
      _
    $region19: #{rnn_model_forward.1} parent=1 // pred_check_branch
      %33 = sbr.rel (0) target = $region21
    $region20: #{rnn_model_forward.1} parent=1 // pred_region
      %35 = vsyncadd [#allocation5], 0
      %s36 = sshll.u32 %s4, 4
      %s37 = int_to_ptr.hbm [resolvable:$true] %s36
      %s38 = sshll.u32 [#allocation4], 4
      %s39 = int_to_ptr.vmem [resolvable:$true] %s38
      %44 = dma.hbm_to_vmem [thread:$0]  %s37, 1024, %s39, [#allocation5], 64, 64, 4
    $region21: #{rnn_model_forward.1} parent=1 // pred_fallthru
      _
    // Predicated region
    $region22: #{rnn_model_forward.1} parent=1 // pred_check
      _
    $region23: #{rnn_model_forward.1} parent=1 // pred_check_branch
      %46 = sbr.rel (0) target = $region25
    $region24: #{rnn_model_forward.1} parent=1 // pred_region
      _
    $region25: #{rnn_model_forward.1} parent=1 // pred_fallthru
      _
    // Predicated region
    $region26: #{rnn_model_forward.1} parent=1 // pred_check
      _
    $region27: #{rnn_model_forward.1} parent=1 // pred_check_branch
      %48 = sbr.rel (0) target = $region29
    $region28: #{rnn_model_forward.1} parent=1 // pred_region
      %50 = dma.done [#allocation3], 1024
    $region29: #{rnn_model_forward.1} parent=1 // pred_fallthru
      _
    // Predicated region
    $region30: #{rnn_model_forward.1} parent=1 // pred_check
      _
    $region31: #{rnn_model_forward.1} parent=1 // pred_check_branch
      %52 = sbr.rel (0) target = $region33
    $region32: #{rnn_model_forward.1} parent=1 // pred_region
      %54 = dma.done [#allocation5], 1024
    $region33: #{rnn_model_forward.1} parent=1 // pred_fallthru
      _
    %v56 = vld [vmem:[%s0] sm:$0xf]
    %v57 = vld [vmem:[%s1] sm:$0xf]
    %v58 = vld [vmem:[%s1 + $0x4] sm:$0xf]
    %v59 = vld [vmem:[%s3] sm:$0x1]
    %v61 = vperm.slane %v59, 0
    %v65 = vunpack.c.l.b16 %v57
    %v66 = vunpack.c.l.b16 %v58
    %v67 = vpack.c.b16 %v66, %v65
    %vm69 = vcmask 130048
    %v71 = vsel %vm69, %v56, 0
    %73 = vmatpush.bf16.msra.mxu0 0
    %74 = vmatpush.bf16.msra.mxu0 0
    %75 = vmatpush.bf16.msra.mxu0 0
    %76 = vmatpush.bf16.msra.mxu0 0
    %77 = vmatpush.bf16.msra.mxu0 0
    %78 = vmatpush.bf16.msra.mxu0 0
    %79 = vmatpush.bf16.msra.mxu0 0
    %80 = vmatpush.bf16.msra.mxu0 %v67
    %81 = vmatmul.bf16.gmra.mxu0 %v71
    %v82 = vpop.f32.mrf.mxu0
    %v83 = vadd.f32 %v61, %v82
    %v84 = vpop.f32.mrf.mxu0
    %85 = vdwg.mxu0
    %v86 = vxor.u32 %v83, 2147483648
    %v87 = vmul.f32 %v86, 1.442695
    %v88 = vpow.pop %v87
    %v89 = vadd.f32 %v88, 1.0
    %v90 = vrcp.pop %v89
    %v91 = vmul.f32 %v89, %v90
    %v92 = vsub.f32 1.0, %v91
    %v93 = vmul.f32 %v90, %v92
    %v94 = vadd.f32 %v90, %v93
    %vm95 = vweird.f32 %v89
    %vm96 = vweird.f32 %v90
    %vm97 = vmor %vm95, %vm96
    %v98 = vsel %vm97, %v90, %v94
    %v99 = vand.u32 2147483647, %v89
    %vm100 = vcmp.eq.f32.partialorder %v99, 8.507059e+37
    %v101 = vand.u32 %v89, 2147483648
    %v102 = vor.u32 1.1754944e-38, %v101
    %v103 = vsel %vm100, %v102, %v98
    %v104 = vmul.f32 1.0, %v103
    %v105 = vtanh.pop %v83
    %106 = vrot.lane.b32.xlu0 %v105, 96
    %v107 = vpop.permute.xlu0 %106
    %108 = vrot.lane.b32.xlu0 %v104, 64
    %v109 = vpop.permute.xlu0 %108
    %v110 = vmul.f32 %v104, %v107
    %v111 = vtanh.pop %v110
    %v112 = vmul.f32 %v109, %v111
    %v113 = vpack.c.bf16 %v112, %v112
    %v114 = vld [vmem:[#allocation2] sm:$0xf]
    %v115 = vld [vmem:[#allocation2 + $0x4] sm:$0xf]
    %v116 = vld [vmem:[#allocation2 + $0x8] sm:$0xf]
    %v117 = vld [vmem:[#allocation2 + $0xc] sm:$0xf]
    %v118 = vld [vmem:[#allocation2 + $0x10] sm:$0xf]
    %v119 = vld [vmem:[#allocation2 + $0x14] sm:$0xf]
    %v120 = vld [vmem:[#allocation2 + $0x18] sm:$0xf]
    %v121 = vld [vmem:[#allocation2 + $0x1c] sm:$0xf]
    %v122 = vld [vmem:[#allocation2 + $0x20] sm:$0xf]
    %v123 = vld [vmem:[#allocation2 + $0x24] sm:$0xf]
    %v124 = vld [vmem:[#allocation2 + $0x28] sm:$0xf]
    %v125 = vld [vmem:[#allocation2 + $0x2c] sm:$0xf]
    %v126 = vld [vmem:[#allocation2 + $0x30] sm:$0xf]
    %v127 = vld [vmem:[#allocation2 + $0x34] sm:$0xf]
    %v128 = vld [vmem:[#allocation2 + $0x38] sm:$0xf]
    %v129 = vld [vmem:[#allocation2 + $0x3c] sm:$0xf]
    %s130 = scalar_lea.vmem %s3, 1
    %v131 = vld [vmem:[%s130] sm:$0x1]
    %v133 = vperm.slane %v131, 0
    %v151 = vunpack.c.l.b16 %v114
    %v152 = vunpack.c.l.b16 %v115
    %v153 = vunpack.c.l.b16 %v116
    %v154 = vunpack.c.l.b16 %v117
    %v155 = vunpack.c.l.b16 %v118
    %v156 = vunpack.c.l.b16 %v119
    %v157 = vunpack.c.l.b16 %v120
    %v158 = vunpack.c.l.b16 %v121
    %v159 = vunpack.c.l.b16 %v122
    %v160 = vunpack.c.l.b16 %v123
    %v161 = vunpack.c.l.b16 %v124
    %v162 = vunpack.c.l.b16 %v125
    %v163 = vunpack.c.l.b16 %v126
    %v164 = vunpack.c.l.b16 %v127
    %v165 = vunpack.c.l.b16 %v128
    %v166 = vunpack.c.l.b16 %v129
    %v167 = vpack.c.b16 %v152, %v151
    %v168 = vpack.c.b16 %v154, %v153
    %v169 = vpack.c.b16 %v156, %v155
    %v170 = vpack.c.b16 %v158, %v157
    %v171 = vpack.c.b16 %v160, %v159
    %v172 = vpack.c.b16 %v162, %v161
    %v173 = vpack.c.b16 %v164, %v163
    %v174 = vpack.c.b16 %v166, %v165
    %183 = vmatpush.bf16.msra.mxu0 %v174
    %184 = vmatpush.bf16.msra.mxu0 %v173
    %185 = vmatpush.bf16.msra.mxu0 %v172
    %186 = vmatpush.bf16.msra.mxu0 %v171
    %187 = vmatpush.bf16.msra.mxu0 %v170
    %188 = vmatpush.bf16.msra.mxu0 %v169
    %189 = vmatpush.bf16.msra.mxu0 %v168
    %190 = vmatpush.bf16.msra.mxu0 %v167
    %191 = vmatmul.bf16.gmra.mxu0 %v113
    %v192 = vpop.f32.mrf.mxu0
    %v193 = vadd.f32 %v133, %v192
    %v194 = vpop.f32.mrf.mxu0
    %195 = vdwg.mxu0
    %v196 = vxor.u32 %v193, 2147483648
    %v197 = vmul.f32 %v196, 1.442695
    %v198 = vpow.pop %v197
    %v199 = vadd.f32 %v198, 1.0
    %v200 = vrcp.pop %v199
    %v201 = vmul.f32 %v199, %v200
    %v202 = vsub.f32 1.0, %v201
    %v203 = vmul.f32 %v200, %v202
    %v204 = vadd.f32 %v200, %v203
    %vm205 = vweird.f32 %v199
    %vm206 = vweird.f32 %v200
    %vm207 = vmor %vm205, %vm206
    %v208 = vsel %vm207, %v200, %v204
    %v209 = vand.u32 2147483647, %v199
    %vm210 = vcmp.eq.f32.partialorder %v209, 8.507059e+37
    %v211 = vand.u32 %v199, 2147483648
    %v212 = vor.u32 1.1754944e-38, %v211
    %v213 = vsel %vm210, %v212, %v208
    %v214 = vmul.f32 1.0, %v213
    %v215 = vtanh.pop %v193
    %216 = vrot.lane.b32.xlu0 %v215, 96
    %v217 = vpop.permute.xlu0 %216
    %218 = vrot.lane.b32.xlu0 %v214, 64
    %v219 = vpop.permute.xlu0 %218
    %v220 = vmul.f32 %v214, %v217
    %v221 = vtanh.pop %v220
    %v222 = vmul.f32 %v219, %v221
    %v223 = vpack.c.bf16 %v222, %v222
    %v224 = vld [vmem:[#allocation4] sm:$0xf]
    %v225 = vld [vmem:[#allocation4 + $0x4] sm:$0xf]
    %v226 = vld [vmem:[#allocation4 + $0x8] sm:$0xf]
    %v227 = vld [vmem:[#allocation4 + $0xc] sm:$0xf]
    %v228 = vld [vmem:[#allocation4 + $0x10] sm:$0xf]
    %v229 = vld [vmem:[#allocation4 + $0x14] sm:$0xf]
    %v230 = vld [vmem:[#allocation4 + $0x18] sm:$0xf]
    %v231 = vld [vmem:[#allocation4 + $0x1c] sm:$0xf]
    %v232 = vld [vmem:[#allocation4 + $0x20] sm:$0xf]
    %v233 = vld [vmem:[#allocation4 + $0x24] sm:$0xf]
    %v234 = vld [vmem:[#allocation4 + $0x28] sm:$0xf]
    %v235 = vld [vmem:[#allocation4 + $0x2c] sm:$0xf]
    %v236 = vld [vmem:[#allocation4 + $0x30] sm:$0xf]
    %v237 = vld [vmem:[#allocation4 + $0x34] sm:$0xf]
    %v238 = vld [vmem:[#allocation4 + $0x38] sm:$0xf]
    %v239 = vld [vmem:[#allocation4 + $0x3c] sm:$0xf]
    %v240 = vld [vmem:[%s5] sm:$0x1]
    %v242 = vperm.slane %v240, 0
    %v260 = vunpack.c.l.b16 %v224
    %v261 = vunpack.c.l.b16 %v225
    %v262 = vunpack.c.l.b16 %v226
    %v263 = vunpack.c.l.b16 %v227
    %v264 = vunpack.c.l.b16 %v228
    %v265 = vunpack.c.l.b16 %v229
    %v266 = vunpack.c.l.b16 %v230
    %v267 = vunpack.c.l.b16 %v231
    %v268 = vunpack.c.l.b16 %v232
    %v269 = vunpack.c.l.b16 %v233
    %v270 = vunpack.c.l.b16 %v234
    %v271 = vunpack.c.l.b16 %v235
    %v272 = vunpack.c.l.b16 %v236
    %v273 = vunpack.c.l.b16 %v237
    %v274 = vunpack.c.l.b16 %v238
    %v275 = vunpack.c.l.b16 %v239
    %v276 = vpack.c.b16 %v261, %v260
    %v277 = vpack.c.b16 %v263, %v262
    %v278 = vpack.c.b16 %v265, %v264
    %v279 = vpack.c.b16 %v267, %v266
    %v280 = vpack.c.b16 %v269, %v268
    %v281 = vpack.c.b16 %v271, %v270
    %v282 = vpack.c.b16 %v273, %v272
    %v283 = vpack.c.b16 %v275, %v274
    %292 = vmatpush.bf16.msra.mxu0 %v283
    %293 = vmatpush.bf16.msra.mxu0 %v282
    %294 = vmatpush.bf16.msra.mxu0 %v281
    %295 = vmatpush.bf16.msra.mxu0 %v280
    %296 = vmatpush.bf16.msra.mxu0 %v279
    %297 = vmatpush.bf16.msra.mxu0 %v278
    %298 = vmatpush.bf16.msra.mxu0 %v277
    %299 = vmatpush.bf16.msra.mxu0 %v276
    %300 = vmatmul.bf16.gmra.mxu0 %v223
    %v301 = vpop.f32.mrf.mxu0
    %v302 = vadd.f32 %v242, %v301
    %v303 = vpop.f32.mrf.mxu0
    %304 = vdwg.mxu0
    %305 = vst [vmem:[%s6] sm:$0xff] %v302
    // Predicated region
    $region34: #{rnn_model_forward.1} parent=1 // pred_check
      _
    $region35: #{rnn_model_forward.1} parent=1 // pred_check_branch
      %307 = sbr.rel (0) target = $region37
    $region36: #{rnn_model_forward.1} parent=1 // pred_region
      _
    $region37: #{rnn_model_forward.1} parent=1 // pred_fallthru
      _
    // Predicated region
    $region38: #{rnn_model_forward.1} parent=1 // pred_check
      _
    $region39: #{rnn_model_forward.1} parent=1 // pred_check_branch
      %309 = sbr.rel (0) target = $region41
    $region40: #{rnn_model_forward.1} parent=1 // pred_region
      _
    $region41: #{rnn_model_forward.1} parent=1 // pred_fallthru
      _
    %310 = vsyncpa [#allocation3], 1
    %311 = vsyncpa [#allocation5], 1

</llo_original>
